<compile_context>
chip_gen: v5e
topology: v5e:2x2
jax: 0.10.0
libtpu: 0.0.40
codegen_flags: <defaults>
</compile_context>

<pallas_src>
import functools

import jax
import jax.numpy as jnp
from jax.experimental import pallas as pl
from jax.experimental.pallas import tpu as pltpu


# -----------------------------------------------------------------------------
# Pallas kernel: fused multi-head attention for a tile of the batch
# -----------------------------------------------------------------------------
def _attention_kernel(
    x_ref,      # (b_tile, E_pad, d)
    wq_ref,     # (H, d, dh)   per-head Q projection
    wk_ref,     # (H, d, dh)   per-head K projection
    wv_ref,     # (H, d, dh)   per-head V projection
    bq_ref,     # (H, 1, dh)
    bk_ref,     # (H, 1, dh)
    bv_ref,     # (H, 1, dh)
    wp_ref,     # (H, dh, d)   per-head slice of the output projection
    bp_ref,     # (1, 1, d)
    o_ref,      # (b_tile, E_pad, d)
    *,
    n_heads: int,
    e_valid: int,
    scale: float,
    compute_dtype,
):
    bt, ep, d = x_ref.shape
    h = n_heads
    dh = d // h
    g = bt * h
    f32 = jnp.float32

    x = x_ref[...].astype(compute_dtype)                      # (bt, ep, d)
    # Replicate the token block along a new head axis and fold (bt, h) -> g.
    # Only leading dims are touched, so this is layout-cheap.
    xb = jnp.broadcast_to(x[:, None], (bt, h, ep, d)).reshape(g, ep, d)

    def bcast_w(w_ref, a, b):      # (h, a, b) -> (g, a, b)
        w = w_ref[...].astype(compute_dtype)
        return jnp.broadcast_to(w[None], (bt, h, a, b)).reshape(g, a, b)

    def bcast_b(b_ref):            # (h, 1, dh) -> (g, 1, dh), kept in f32
        b = b_ref[...]
        return jnp.broadcast_to(b[None], (bt, h, 1, dh)).reshape(g, 1, dh)

    # ---- Q / K / V projections (single-batch-dim batched matmuls) ----
    q = jnp.einsum('gtd,gdf->gtf', xb, bcast_w(wq_ref, d, dh),
                   preferred_element_type=f32) + bcast_b(bq_ref)   # (g, ep, dh)
    k = jnp.einsum('gtd,gdf->gtf', xb, bcast_w(wk_ref, d, dh),
                   preferred_element_type=f32) + bcast_b(bk_ref)   # (g, ep, dh)
    v = jnp.einsum('gtd,gdf->gtf', xb, bcast_w(wv_ref, d, dh),
                   preferred_element_type=f32) + bcast_b(bv_ref)   # (g, ep, dh)

    # ---- Scaled dot-product attention, per (batch, head) = g ----
    logits = jnp.einsum('gqf,gkf->gqk',
                        q.astype(compute_dtype), k.astype(compute_dtype),
                        preferred_element_type=f32) * scale        # (g, ep, ep)

    if ep != e_valid:  # mask padded key columns (static check)
        key_idx = jax.lax.broadcasted_iota(jnp.int32, (1, 1, ep), 2)
        logits = jnp.where(key_idx < e_valid, logits, -1e30)

    m = jnp.max(logits, axis=-1, keepdims=True)
    p = jnp.exp(logits - m)
    s = jnp.sum(p, axis=-1, keepdims=True)
    attn = p / s                                                   # exact softmax
    # attention dropout: identity in eval mode

    ctx = jnp.einsum('gqk,gkf->gqf',
                     attn.astype(compute_dtype), v.astype(compute_dtype),
                     preferred_element_type=f32)                   # (g, ep, dh)

    # ---- Output projection: per-head partials, summed over heads ----
    part = jnp.einsum('gqf,gfd->gqd',
                      ctx.astype(compute_dtype), bcast_w(wp_ref, dh, d),
                      preferred_element_type=f32)                  # (g, ep, d)
    out = part.reshape(bt, h, ep, d).sum(axis=1) + bp_ref[...]     # (bt, ep, d)
    # output dropout: identity in eval mode

    o_ref[...] = out.astype(o_ref.dtype)


# -----------------------------------------------------------------------------
# Wrapper
# -----------------------------------------------------------------------------
def attention_forward(x, params, *, n_heads, b_tile=None,
                      compute_dtype=jnp.float32):
    """x: (B, E, d) float32. Returns (B, E, d) float32 (eval-mode forward)."""
    B, E, d = x.shape
    assert d % n_heads == 0
    dh = d // n_heads
    scale = dh ** (-0.5)
    H = n_heads

    # --- pad E to a sublane multiple (8 for f32) ---
    E_pad = pl.cdiv(E, 8) * 8

    # --- batch tiling: fuse batch into the block; use <=2 grid steps so the
    #     two TensorCores on v7x both get work (1-TC chips just see 1-2 steps).
    if b_tile is None:
        num_tiles = min(B, 2)
        b_tile = pl.cdiv(B, num_tiles)
    num_tiles = pl.cdiv(B, b_tile)
    B_pad = num_tiles * b_tile

    if (B_pad, E_pad) != (B, E):
        x_in = jnp.zeros((B_pad, E_pad, d), jnp.float32).at[:B, :E, :].set(x)
    else:
        x_in = x.astype(jnp.float32)

    # --- parameter prep (plain JAX, free): PyTorch Linear weight is (out, in).
    Wt = params["qkv_w"].T                                  # (d, 3d): [q | k | v]
    wq = Wt[:, 0 * d:1 * d].reshape(d, H, dh).transpose(1, 0, 2)   # (H, d, dh)
    wk = Wt[:, 1 * d:2 * d].reshape(d, H, dh).transpose(1, 0, 2)   # (H, d, dh)
    wv = Wt[:, 2 * d:3 * d].reshape(d, H, dh).transpose(1, 0, 2)   # (H, d, dh)
    bqkv = params["qkv_b"]
    bq = bqkv[0 * d:1 * d].reshape(H, 1, dh)
    bk = bqkv[1 * d:2 * d].reshape(H, 1, dh)
    bv = bqkv[2 * d:3 * d].reshape(H, 1, dh)
    wp = params["proj_w"].T.reshape(H, dh, d)               # (H, dh, d)
    bp = params["proj_b"].reshape(1, 1, d)

    kernel = functools.partial(
        _attention_kernel, n_heads=H, e_valid=E, scale=scale,
        compute_dtype=compute_dtype)

    full_spec = lambda shape: pl.BlockSpec(shape, lambda i: (0,) * len(shape))

    out = pl.pallas_call(
        kernel,
        out_shape=jax.ShapeDtypeStruct((B_pad, E_pad, d), jnp.float32),
        grid=(num_tiles,),
        in_specs=[
            pl.BlockSpec((b_tile, E_pad, d), lambda i: (i, 0, 0)),  # x
            full_spec((H, d, dh)),                                   # wq
            full_spec((H, d, dh)),                                   # wk
            full_spec((H, d, dh)),                                   # wv
            full_spec((H, 1, dh)),                                   # bq
            full_spec((H, 1, dh)),                                   # bk
            full_spec((H, 1, dh)),                                   # bv
            full_spec((H, dh, d)),                                   # wp
            full_spec((1, 1, d)),                                    # bp
        ],
        out_specs=pl.BlockSpec((b_tile, E_pad, d), lambda i: (i, 0, 0)),
        compiler_params=pltpu.CompilerParams(
            dimension_semantics=("parallel",)),
    )(x_in, wq, wk, wv, bq, bk, bv, wp, bp)

    return out[:B, :E, :]


# -----------------------------------------------------------------------------
# Pure-JAX reference (mirrors the PyTorch forward, eval mode)
# -----------------------------------------------------------------------------
def attention_reference(x, params, *, n_heads):
    B, E, d = x.shape
    dh = d // n_heads
    qkv = x @ params["qkv_w"].T + params["qkv_b"]            # (B, E, 3d)
    qkv = qkv.reshape(B, E, 3, n_heads, dh)
    q, k, v = qkv[:, :, 0], qkv[:, :, 1], qkv[:, :, 2]       # (B, E, H, dh)
    logits = jnp.einsum("bthc,bshc->bhts", q, k) * dh ** (-0.5)
    attn = jax.nn.softmax(logits, axis=-1)
    out = jnp.einsum("bhts,bshc->bthc", attn, v).reshape(B, E, d)
    return out @ params["proj_w"].T + params["proj_b"]


if __name__ == "__main__":
    # Small shapes consistent with the module: batch=2, seq E=8, d=32, 4 heads.
    B, E, d, H = 2, 8, 32, 4

    key = jax.random.PRNGKey(0)
    kx, kw1, kb1, kw2, kb2 = jax.random.split(key, 5)
    # Non-zero biases to exercise the bias path (module init uses zeros;
    # forward-pass semantics are identical).
    params = {
        "qkv_w": (jax.random.normal(kw1, (3 * d, d)) * 0.02).astype(jnp.float32),
        "qkv_b": (jax.random.normal(kb1, (3 * d,)) * 0.02).astype(jnp.float32),
        "proj_w": (jax.random.normal(kw2, (d, d)) * 0.02).astype(jnp.float32),
        "proj_b": (jax.random.normal(kb2, (d,)) * 0.02).astype(jnp.float32),
    }
    x = jax.random.normal(kx, (B, E, d), jnp.float32)

    # For v6e/v7x you can pass compute_dtype=jnp.bfloat16 (f32 accumulation is
    # kept); the demo stays in f32 so the numerical check is tight.
    fwd = jax.jit(functools.partial(attention_forward, n_heads=H))
    y = jax.block_until_ready(fwd(x, params))

    y_ref = attention_reference(x, params, n_heads=H)
    assert y.shape == (B, E, d)
    max_diff = float(jnp.max(jnp.abs(y - y_ref)))
    # Tolerance covers f32 accumulation-order / MXU-pass differences only;
    # any semantic bug (wrong head mapping, bias, scale) gives errors >= 1e-2.
    assert jnp.allclose(y, y_ref, rtol=2e-3, atol=1e-4), max_diff

    print("KERNEL_OK")
</pallas_src>

<mosaic_0001>
module attributes {stable_mosaic.version = 11 : i64} {
  func.func @_attention_kernel(%arg0: i32, %arg1: memref<1x8x32xf32, #tpu.memory_space<vmem>>, %arg2: memref<4x32x8xf32, #tpu.memory_space<vmem>>, %arg3: memref<4x32x8xf32, #tpu.memory_space<vmem>>, %arg4: memref<4x32x8xf32, #tpu.memory_space<vmem>>, %arg5: memref<4x1x8xf32, #tpu.memory_space<vmem>>, %arg6: memref<4x1x8xf32, #tpu.memory_space<vmem>>, %arg7: memref<4x1x8xf32, #tpu.memory_space<vmem>>, %arg8: memref<4x8x32xf32, #tpu.memory_space<vmem>>, %arg9: memref<1x1x32xf32, #tpu.memory_space<vmem>>, %arg10: memref<1x8x32xf32, #tpu.memory_space<vmem>>) attributes {dimension_semantics = [#tpu.dimension_semantics<parallel>], iteration_bounds = array<i64: 2>, scalar_prefetch = 0 : i64, scratch_operands = 0 : i64, tpu.core_type = #tpu.core_type<tc>, window_params = [{transform_indices = @transform_0, window_bounds = array<i64: 1, 8, 32>}, {pipeline_mode = #tpu.pipeline_mode<synchronous>, transform_indices = @transform_1, window_bounds = array<i64: 4, 32, 8>}, {pipeline_mode = #tpu.pipeline_mode<synchronous>, transform_indices = @transform_2, window_bounds = array<i64: 4, 32, 8>}, {pipeline_mode = #tpu.pipeline_mode<synchronous>, transform_indices = @transform_3, window_bounds = array<i64: 4, 32, 8>}, {pipeline_mode = #tpu.pipeline_mode<synchronous>, transform_indices = @transform_4, window_bounds = array<i64: 4, 1, 8>}, {pipeline_mode = #tpu.pipeline_mode<synchronous>, transform_indices = @transform_5, window_bounds = array<i64: 4, 1, 8>}, {pipeline_mode = #tpu.pipeline_mode<synchronous>, transform_indices = @transform_6, window_bounds = array<i64: 4, 1, 8>}, {pipeline_mode = #tpu.pipeline_mode<synchronous>, transform_indices = @transform_7, window_bounds = array<i64: 4, 8, 32>}, {pipeline_mode = #tpu.pipeline_mode<synchronous>, transform_indices = @transform_8, window_bounds = array<i64: 1, 1, 32>}, {transform_indices = @transform_9, window_bounds = array<i64: 1, 8, 32>}]} {
    %c0 = arith.constant 0 : index
    %c0_0 = arith.constant 0 : index
    %c0_1 = arith.constant 0 : index
    %0 = vector.load %arg1[%c0, %c0_0, %c0_1] : memref<1x8x32xf32, #tpu.memory_space<vmem>>, vector<1x8x32xf32>
    %1 = vector.shape_cast %0 : vector<1x8x32xf32> to vector<1x1x8x32xf32>
    %2 = vector.shape_cast %1 : vector<1x1x8x32xf32> to vector<1x1x8x32xf32>
    %3 = vector.broadcast %2 : vector<1x1x8x32xf32> to vector<1x4x8x32xf32>
    %4 = vector.shape_cast %3 : vector<1x4x8x32xf32> to vector<4x8x32xf32>
    %c0_2 = arith.constant 0 : index
    %c0_3 = arith.constant 0 : index
    %c0_4 = arith.constant 0 : index
    %5 = vector.load %arg2[%c0_2, %c0_3, %c0_4] : memref<4x32x8xf32, #tpu.memory_space<vmem>>, vector<4x32x8xf32>
    %6 = vector.shape_cast %5 : vector<4x32x8xf32> to vector<1x4x32x8xf32>
    %7 = vector.shape_cast %6 : vector<1x4x32x8xf32> to vector<4x32x8xf32>
    "tpu.trace_start"() <{level = 10 : i32, message = "gtd,gdf->gtf"}> : () -> ()
    %cst = arith.constant dense<0.000000e+00> : vector<4x8x8xf32>
    %8 = tpu.matmul %4, %7, %cst {dimension_numbers = #tpu.dot_dimension_numbers<[2], [1], [1], [2], [0, 0, 0, 1, 1, 2], [0], [0]>} : vector<4x8x32xf32>, vector<4x32x8xf32>, vector<4x8x8xf32> -> vector<4x8x8xf32>
    "tpu.trace_stop"() : () -> ()
    %c0_5 = arith.constant 0 : index
    %c0_6 = arith.constant 0 : index
    %c0_7 = arith.constant 0 : index
    %9 = vector.load %arg5[%c0_5, %c0_6, %c0_7] : memref<4x1x8xf32, #tpu.memory_space<vmem>>, vector<4x1x8xf32>
    %10 = vector.shape_cast %9 : vector<4x1x8xf32> to vector<1x4x1x8xf32>
    %11 = vector.shape_cast %10 : vector<1x4x1x8xf32> to vector<4x1x8xf32>
    %12 = vector.broadcast %11 : vector<4x1x8xf32> to vector<4x8x8xf32>
    %13 = arith.addf %8, %12 : vector<4x8x8xf32>
    %c0_8 = arith.constant 0 : index
    %c0_9 = arith.constant 0 : index
    %c0_10 = arith.constant 0 : index
    %14 = vector.load %arg3[%c0_8, %c0_9, %c0_10] : memref<4x32x8xf32, #tpu.memory_space<vmem>>, vector<4x32x8xf32>
    %15 = vector.shape_cast %14 : vector<4x32x8xf32> to vector<1x4x32x8xf32>
    %16 = vector.shape_cast %15 : vector<1x4x32x8xf32> to vector<4x32x8xf32>
    "tpu.trace_start"() <{level = 10 : i32, message = "gtd,gdf->gtf"}> : () -> ()
    %cst_11 = arith.constant dense<0.000000e+00> : vector<4x8x8xf32>
    %17 = tpu.matmul %4, %16, %cst_11 {dimension_numbers = #tpu.dot_dimension_numbers<[2], [1], [1], [2], [0, 0, 0, 1, 1, 2], [0], [0]>} : vector<4x8x32xf32>, vector<4x32x8xf32>, vector<4x8x8xf32> -> vector<4x8x8xf32>
    "tpu.trace_stop"() : () -> ()
    %c0_12 = arith.constant 0 : index
    %c0_13 = arith.constant 0 : index
    %c0_14 = arith.constant 0 : index
    %18 = vector.load %arg6[%c0_12, %c0_13, %c0_14] : memref<4x1x8xf32, #tpu.memory_space<vmem>>, vector<4x1x8xf32>
    %19 = vector.shape_cast %18 : vector<4x1x8xf32> to vector<1x4x1x8xf32>
    %20 = vector.shape_cast %19 : vector<1x4x1x8xf32> to vector<4x1x8xf32>
    %21 = vector.broadcast %20 : vector<4x1x8xf32> to vector<4x8x8xf32>
    %22 = arith.addf %17, %21 : vector<4x8x8xf32>
    %c0_15 = arith.constant 0 : index
    %c0_16 = arith.constant 0 : index
    %c0_17 = arith.constant 0 : index
    %23 = vector.load %arg4[%c0_15, %c0_16, %c0_17] : memref<4x32x8xf32, #tpu.memory_space<vmem>>, vector<4x32x8xf32>
    %24 = vector.shape_cast %23 : vector<4x32x8xf32> to vector<1x4x32x8xf32>
    %25 = vector.shape_cast %24 : vector<1x4x32x8xf32> to vector<4x32x8xf32>
    "tpu.trace_start"() <{level = 10 : i32, message = "gtd,gdf->gtf"}> : () -> ()
    %cst_18 = arith.constant dense<0.000000e+00> : vector<4x8x8xf32>
    %26 = tpu.matmul %4, %25, %cst_18 {dimension_numbers = #tpu.dot_dimension_numbers<[2], [1], [1], [2], [0, 0, 0, 1, 1, 2], [0], [0]>} : vector<4x8x32xf32>, vector<4x32x8xf32>, vector<4x8x8xf32> -> vector<4x8x8xf32>
    "tpu.trace_stop"() : () -> ()
    %c0_19 = arith.constant 0 : index
    %c0_20 = arith.constant 0 : index
    %c0_21 = arith.constant 0 : index
    %27 = vector.load %arg7[%c0_19, %c0_20, %c0_21] : memref<4x1x8xf32, #tpu.memory_space<vmem>>, vector<4x1x8xf32>
    %28 = vector.shape_cast %27 : vector<4x1x8xf32> to vector<1x4x1x8xf32>
    %29 = vector.shape_cast %28 : vector<1x4x1x8xf32> to vector<4x1x8xf32>
    %30 = vector.broadcast %29 : vector<4x1x8xf32> to vector<4x8x8xf32>
    %31 = arith.addf %26, %30 : vector<4x8x8xf32>
    "tpu.trace_start"() <{level = 10 : i32, message = "gqf,gkf->gqk"}> : () -> ()
    %cst_22 = arith.constant dense<0.000000e+00> : vector<4x8x8xf32>
    %32 = tpu.matmul %13, %22, %cst_22 {dimension_numbers = #tpu.dot_dimension_numbers<[2], [2], [1], [1], [0, 0, 0, 1, 1, 1], [0], [0]>} : vector<4x8x8xf32>, vector<4x8x8xf32>, vector<4x8x8xf32> -> vector<4x8x8xf32>
    "tpu.trace_stop"() : () -> ()
    %cst_23 = arith.constant 0.353553385 : f32
    %33 = vector.broadcast %cst_23 : f32 to vector<4x8x8xf32>
    %34 = arith.mulf %32, %33 : vector<4x8x8xf32>
    %cst_24 = arith.constant dense<0xFF800000> : vector<4x8xf32>
    %35 = vector.multi_reduction <maximumf>, %34, %cst_24 [2] : vector<4x8x8xf32> to vector<4x8xf32>
    %36 = vector.shape_cast %35 : vector<4x8xf32> to vector<4x8x1xf32>
    %37 = vector.broadcast %36 : vector<4x8x1xf32> to vector<4x8x8xf32>
    %38 = arith.subf %34, %37 : vector<4x8x8xf32>
    %39 = math.exp %38 : vector<4x8x8xf32>
    %cst_25 = arith.constant dense<0.000000e+00> : vector<4x8xf32>
    %40 = vector.multi_reduction <add>, %39, %cst_25 [2] : vector<4x8x8xf32> to vector<4x8xf32>
    %41 = vector.shape_cast %40 : vector<4x8xf32> to vector<4x8x1xf32>
    %42 = vector.broadcast %41 : vector<4x8x1xf32> to vector<4x8x8xf32>
    %43 = arith.divf %39, %42 : vector<4x8x8xf32>
    "tpu.trace_start"() <{level = 10 : i32, message = "gqk,gkf->gqf"}> : () -> ()
    %cst_26 = arith.constant dense<0.000000e+00> : vector<4x8x8xf32>
    %44 = tpu.matmul %43, %31, %cst_26 {dimension_numbers = #tpu.dot_dimension_numbers<[2], [1], [1], [2], [0, 0, 0, 1, 1, 2], [0], [0]>} : vector<4x8x8xf32>, vector<4x8x8xf32>, vector<4x8x8xf32> -> vector<4x8x8xf32>
    "tpu.trace_stop"() : () -> ()
    %c0_27 = arith.constant 0 : index
    %c0_28 = arith.constant 0 : index
    %c0_29 = arith.constant 0 : index
    %45 = vector.load %arg8[%c0_27, %c0_28, %c0_29] : memref<4x8x32xf32, #tpu.memory_space<vmem>>, vector<4x8x32xf32>
    %46 = vector.shape_cast %45 : vector<4x8x32xf32> to vector<1x4x8x32xf32>
    %47 = vector.shape_cast %46 : vector<1x4x8x32xf32> to vector<4x8x32xf32>
    "tpu.trace_start"() <{level = 10 : i32, message = "gqf,gfd->gqd"}> : () -> ()
    %cst_30 = arith.constant dense<0.000000e+00> : vector<4x8x32xf32>
    %48 = tpu.matmul %44, %47, %cst_30 {dimension_numbers = #tpu.dot_dimension_numbers<[2], [1], [1], [2], [0, 0, 0, 1, 1, 2], [0], [0]>} : vector<4x8x8xf32>, vector<4x8x32xf32>, vector<4x8x32xf32> -> vector<4x8x32xf32>
    "tpu.trace_stop"() : () -> ()
    %49 = vector.shape_cast %48 : vector<4x8x32xf32> to vector<1x4x8x32xf32>
    %cst_31 = arith.constant dense<0.000000e+00> : vector<1x8x32xf32>
    %50 = vector.multi_reduction <add>, %49, %cst_31 [1] : vector<1x4x8x32xf32> to vector<1x8x32xf32>
    %c0_32 = arith.constant 0 : index
    %c0_33 = arith.constant 0 : index
    %c0_34 = arith.constant 0 : index
    %51 = vector.load %arg9[%c0_32, %c0_33, %c0_34] : memref<1x1x32xf32, #tpu.memory_space<vmem>>, vector<1x1x32xf32>
    %52 = vector.broadcast %51 : vector<1x1x32xf32> to vector<1x8x32xf32>
    %53 = arith.addf %50, %52 : vector<1x8x32xf32>
    %c0_35 = arith.constant 0 : index
    %c0_36 = arith.constant 0 : index
    %c0_37 = arith.constant 0 : index
    %54 = vector.load %arg10[%c0_35, %c0_36, %c0_37] : memref<1x8x32xf32, #tpu.memory_space<vmem>>, vector<1x8x32xf32>
    tpu.vector_store %arg10[%c0_35, %c0_36, %c0_37], %53 {strides = array<i32>} : memref<1x8x32xf32, #tpu.memory_space<vmem>>, vector<1x8x32xf32>,
    return
  }
  func.func @transform_0(%arg0: i32) -> (i32, i32, i32) {
    %c0_i32 = arith.constant 0 : i32
    %c0_i32_0 = arith.constant 0 : i32
    %c0_i32_1 = arith.constant 0 : i32
    return %arg0, %c0_i32, %c0_i32_0 : i32, i32, i32
  }
  func.func @transform_1(%arg0: i32) -> (i32, i32, i32) {
    %c0_i32 = arith.constant 0 : i32
    %c0_i32_0 = arith.constant 0 : i32
    %c0_i32_1 = arith.constant 0 : i32
    %c0_i32_2 = arith.constant 0 : i32
    return %c0_i32, %c0_i32_0, %c0_i32_1 : i32, i32, i32
  }
  func.func @transform_2(%arg0: i32) -> (i32, i32, i32) {
    %c0_i32 = arith.constant 0 : i32
    %c0_i32_0 = arith.constant 0 : i32
    %c0_i32_1 = arith.constant 0 : i32
    %c0_i32_2 = arith.constant 0 : i32
    return %c0_i32, %c0_i32_0, %c0_i32_1 : i32, i32, i32
  }
  func.func @transform_3(%arg0: i32) -> (i32, i32, i32) {
    %c0_i32 = arith.constant 0 : i32
    %c0_i32_0 = arith.constant 0 : i32
    %c0_i32_1 = arith.constant 0 : i32
    %c0_i32_2 = arith.constant 0 : i32
    return %c0_i32, %c0_i32_0, %c0_i32_1 : i32, i32, i32
  }
  func.func @transform_4(%arg0: i32) -> (i32, i32, i32) {
    %c0_i32 = arith.constant 0 : i32
    %c0_i32_0 = arith.constant 0 : i32
    %c0_i32_1 = arith.constant 0 : i32
    %c0_i32_2 = arith.constant 0 : i32
    return %c0_i32, %c0_i32_0, %c0_i32_1 : i32, i32, i32
  }
  func.func @transform_5(%arg0: i32) -> (i32, i32, i32) {
    %c0_i32 = arith.constant 0 : i32
    %c0_i32_0 = arith.constant 0 : i32
    %c0_i32_1 = arith.constant 0 : i32
    %c0_i32_2 = arith.constant 0 : i32
    return %c0_i32, %c0_i32_0, %c0_i32_1 : i32, i32, i32
  }
  func.func @transform_6(%arg0: i32) -> (i32, i32, i32) {
    %c0_i32 = arith.constant 0 : i32
    %c0_i32_0 = arith.constant 0 : i32
    %c0_i32_1 = arith.constant 0 : i32
    %c0_i32_2 = arith.constant 0 : i32
    return %c0_i32, %c0_i32_0, %c0_i32_1 : i32, i32, i32
  }
  func.func @transform_7(%arg0: i32) -> (i32, i32, i32) {
    %c0_i32 = arith.constant 0 : i32
    %c0_i32_0 = arith.constant 0 : i32
    %c0_i32_1 = arith.constant 0 : i32
    %c0_i32_2 = arith.constant 0 : i32
    return %c0_i32, %c0_i32_0, %c0_i32_1 : i32, i32, i32
  }
  func.func @transform_8(%arg0: i32) -> (i32, i32, i32) {
    %c0_i32 = arith.constant 0 : i32
    %c0_i32_0 = arith.constant 0 : i32
    %c0_i32_1 = arith.constant 0 : i32
    %c0_i32_2 = arith.constant 0 : i32
    return %c0_i32, %c0_i32_0, %c0_i32_1 : i32, i32, i32
  }
  func.func @transform_9(%arg0: i32) -> (i32, i32, i32) {
    %c0_i32 = arith.constant 0 : i32
    %c0_i32_0 = arith.constant 0 : i32
    %c0_i32_1 = arith.constant 0 : i32
    return %arg0, %c0_i32, %c0_i32_0 : i32, i32, i32
  }
}

</mosaic_0001>

<llo_original>
// kernel: attention_forward.1
$region0: #{attention_forward.1}
  #allocation0 [shape = 'u32[]', space=smem, size = 0x4, offset = 0x4, fixed_abs, tag = 'smem constant byte address 0x4 - core index']
  #allocation1 [shape = 'u32[72,128]{1,0:T(1,128)}', space=vmem, size = 0x9000, scoped, tag = 'internal scratch']
  %s0 = inlined_call_operand.vmem [shape: f32[2,8,32], index: 0, kind: input, shape index: {}]
  %s1 = inlined_call_operand.vmem [shape: f32[4,32,8], index: 1, kind: input, shape index: {}]
  %s2 = inlined_call_operand.vmem [shape: f32[4,32,8], index: 2, kind: input, shape index: {}]
  %s3 = inlined_call_operand.vmem [shape: f32[4,32,8], index: 3, kind: input, shape index: {}]
  %s4 = inlined_call_operand.vmem [shape: f32[4,1,8], index: 4, kind: input, shape index: {}]
  %s5 = inlined_call_operand.vmem [shape: f32[4,1,8], index: 5, kind: input, shape index: {}]
  %s6 = inlined_call_operand.vmem [shape: f32[4,1,8], index: 6, kind: input, shape index: {}]
  %s7 = inlined_call_operand.vmem [shape: f32[4,8,32], index: 7, kind: input, shape index: {}]
  %s8 = inlined_call_operand.vmem [shape: f32[1,1,32], index: 8, kind: input, shape index: {}]
  %s9 = inlined_call_operand.hbm [shape: f32[2,8,32], index: 9, kind: output, shape index: {}]
  %s10 = sld [smem:[#allocation0]]
  $region69: #{attention_forward.1} parent=0
    _
  %s12 = ssub.s32 1, %s10
  %s13 = scalar_select 0, %s12, %s10
  $region1: #{attention_forward.1} parent=0
    #allocation2 [shape = 'u8[8192]{0}', space=vmem, size = 0x2000, scoped, tag = 'output window, operand 0']
    #allocation3 [shape = 's32[2]{0}', space=sflag, size = 0x8, scoped, tag = 'scoped memory for attention_forward.1']
    %14 = vsyncpa [#allocation3], 0
    %s15 = scalar_lea.sflag [#allocation3], 1
    %16 = vsyncpa %s15, 0
    loop: start=0, step=1, limit=4
    $region2: #{attention_forward.1} parent=1 // loop_pre_header
      _
    $region3: #{attention_forward.1} parent=1 // loop_header
      %s18 = sphi 0, %s22
      %p19 = scmp.ge.s32.totalorder %s18, 4
      %s28 = sphi 0, %s30
      %s31 = sphi 0, %s28
      %s32 = sphi 0, %s31
      %s48 = sphi 0, %s32
      %s52 = sphi 0, %s52
      %s54 = sphi 0, %s52
      %s55 = sphi 0, %s54
      %s69 = sphi 0, %s55
      %s73 = sphi 0, %s73
      %s75 = sphi 0, %s73
      %s76 = sphi 0, %s75
      %s90 = sphi 0, %s76
      %s94 = sphi 0, %s94
      %s96 = sphi 0, %s94
      %s97 = sphi 0, %s96
      %s111 = sphi 0, %s97
      %s115 = sphi 0, %s115
      %s117 = sphi 0, %s115
      %s118 = sphi 0, %s117
      %s132 = sphi 0, %s118
      %s136 = sphi 0, %s136
      %s138 = sphi 0, %s136
      %s139 = sphi 0, %s138
      %s153 = sphi 0, %s139
      %s157 = sphi 0, %s157
      %s159 = sphi 0, %s157
      %s160 = sphi 0, %s159
      %s174 = sphi 0, %s160
      %s178 = sphi 0, %s178
      %s180 = sphi 0, %s178
      %s181 = sphi 0, %s180
      %s195 = sphi 0, %s181
      %s199 = sphi 0, %s199
      %s201 = sphi 0, %s199
      %s202 = sphi 0, %s201
      %s216 = sphi 0, %s202
      %s222 = sphi 0, %s224
      %s225 = sphi 0, %s222
      %s226 = sphi 0, %s225
      %s242 = sphi 0, %s226
    $region4: #{attention_forward.1} parent=1 // loop_header_branch
      %21 = sbr.rel (%p19) target = $region8
    $region5: #{attention_forward.1} parent=1 // loop_body
      %s23 = ssub.s32 %s18, 1
      %s24 = ssub.s32 %s18, 2
      %s25 = sadd.s32 %s18, 1
      %s26 = ssub.s32 %s18, %s25
      %p27 = scmp.eq.s32.totalorder %s26, 0
      %s29 = sadd.s32 %s28, 1
      %s30 = scalar_select %p27, %s28, %s29
      %p33 = pneg %p27
      %p34 = scmp.eq.s32.totalorder %s18, 1
      %p35 = por %p33, %p34
      %p36 = scmp.ne.s32.totalorder %s28, %s31
      %p37 = scmp.eq.s32.totalorder %s18, 0
      %p38 = por %p36, %p37
      %p39 = scmp.ne.s32.totalorder %s28, %s31
      %p40 = scmp.eq.s32.totalorder %s23, 1
      %p41 = por %p39, %p40
      %p42 = scmp.ne.s32.totalorder %s31, %s32
      %p43 = scmp.eq.s32.totalorder %s23, 0
      %p44 = por %p42, %p43
      %p45 = scmp.ne.s32.totalorder %s31, %s32
      %p46 = scmp.eq.s32.totalorder %s24, 1
      %p47 = por %p45, %p46
      %p49 = scmp.ne.s32.totalorder %s32, %s48
      %p50 = scmp.eq.s32.totalorder %s24, 0
      %p51 = por %p49, %p50
      %s53 = sadd.s32 %s52, 1
      %p56 = scmp.eq.s32.totalorder %s18, 1
      %p57 = scmp.ne.s32.totalorder %s52, %s54
      %p58 = scmp.eq.s32.totalorder %s18, 0
      %p59 = por %p57, %p58
      %p60 = scmp.ne.s32.totalorder %s52, %s54
      %p61 = scmp.eq.s32.totalorder %s23, 1
      %p62 = por %p60, %p61
      %p63 = scmp.ne.s32.totalorder %s54, %s55
      %p64 = scmp.eq.s32.totalorder %s23, 0
      %p65 = por %p63, %p64
      %p66 = scmp.ne.s32.totalorder %s54, %s55
      %p67 = scmp.eq.s32.totalorder %s24, 1
      %p68 = por %p66, %p67
      %p70 = scmp.ne.s32.totalorder %s55, %s69
      %p71 = scmp.eq.s32.totalorder %s24, 0
      %p72 = por %p70, %p71
      %s74 = sadd.s32 %s73, 1
      %p77 = scmp.eq.s32.totalorder %s18, 1
      %p78 = scmp.ne.s32.totalorder %s73, %s75
      %p79 = scmp.eq.s32.totalorder %s18, 0
      %p80 = por %p78, %p79
      %p81 = scmp.ne.s32.totalorder %s73, %s75
      %p82 = scmp.eq.s32.totalorder %s23, 1
      %p83 = por %p81, %p82
      %p84 = scmp.ne.s32.totalorder %s75, %s76
      %p85 = scmp.eq.s32.totalorder %s23, 0
      %p86 = por %p84, %p85
      %p87 = scmp.ne.s32.totalorder %s75, %s76
      %p88 = scmp.eq.s32.totalorder %s24, 1
      %p89 = por %p87, %p88
      %p91 = scmp.ne.s32.totalorder %s76, %s90
      %p92 = scmp.eq.s32.totalorder %s24, 0
      %p93 = por %p91, %p92
      %s95 = sadd.s32 %s94, 1
      %p98 = scmp.eq.s32.totalorder %s18, 1
      %p99 = scmp.ne.s32.totalorder %s94, %s96
      %p100 = scmp.eq.s32.totalorder %s18, 0
      %p101 = por %p99, %p100
      %p102 = scmp.ne.s32.totalorder %s94, %s96
      %p103 = scmp.eq.s32.totalorder %s23, 1
      %p104 = por %p102, %p103
      %p105 = scmp.ne.s32.totalorder %s96, %s97
      %p106 = scmp.eq.s32.totalorder %s23, 0
      %p107 = por %p105, %p106
      %p108 = scmp.ne.s32.totalorder %s96, %s97
      %p109 = scmp.eq.s32.totalorder %s24, 1
      %p110 = por %p108, %p109
      %p112 = scmp.ne.s32.totalorder %s97, %s111
      %p113 = scmp.eq.s32.totalorder %s24, 0
      %p114 = por %p112, %p113
      %s116 = sadd.s32 %s115, 1
      %p119 = scmp.eq.s32.totalorder %s18, 1
      %p120 = scmp.ne.s32.totalorder %s115, %s117
      %p121 = scmp.eq.s32.totalorder %s18, 0
      %p122 = por %p120, %p121
      %p123 = scmp.ne.s32.totalorder %s115, %s117
      %p124 = scmp.eq.s32.totalorder %s23, 1
      %p125 = por %p123, %p124
      %p126 = scmp.ne.s32.totalorder %s117, %s118
      %p127 = scmp.eq.s32.totalorder %s23, 0
      %p128 = por %p126, %p127
      %p129 = scmp.ne.s32.totalorder %s117, %s118
      %p130 = scmp.eq.s32.totalorder %s24, 1
      %p131 = por %p129, %p130
      %p133 = scmp.ne.s32.totalorder %s118, %s132
      %p134 = scmp.eq.s32.totalorder %s24, 0
      %p135 = por %p133, %p134
      %s137 = sadd.s32 %s136, 1
      %p140 = scmp.eq.s32.totalorder %s18, 1
      %p141 = scmp.ne.s32.totalorder %s136, %s138
      %p142 = scmp.eq.s32.totalorder %s18, 0
      %p143 = por %p141, %p142
      %p144 = scmp.ne.s32.totalorder %s136, %s138
      %p145 = scmp.eq.s32.totalorder %s23, 1
      %p146 = por %p144, %p145
      %p147 = scmp.ne.s32.totalorder %s138, %s139
      %p148 = scmp.eq.s32.totalorder %s23, 0
      %p149 = por %p147, %p148
      %p150 = scmp.ne.s32.totalorder %s138, %s139
      %p151 = scmp.eq.s32.totalorder %s24, 1
      %p152 = por %p150, %p151
      %p154 = scmp.ne.s32.totalorder %s139, %s153
      %p155 = scmp.eq.s32.totalorder %s24, 0
      %p156 = por %p154, %p155
      %s158 = sadd.s32 %s157, 1
      %p161 = scmp.eq.s32.totalorder %s18, 1
      %p162 = scmp.ne.s32.totalorder %s157, %s159
      %p163 = scmp.eq.s32.totalorder %s18, 0
      %p164 = por %p162, %p163
      %p165 = scmp.ne.s32.totalorder %s157, %s159
      %p166 = scmp.eq.s32.totalorder %s23, 1
      %p167 = por %p165, %p166
      %p168 = scmp.ne.s32.totalorder %s159, %s160
      %p169 = scmp.eq.s32.totalorder %s23, 0
      %p170 = por %p168, %p169
      %p171 = scmp.ne.s32.totalorder %s159, %s160
      %p172 = scmp.eq.s32.totalorder %s24, 1
      %p173 = por %p171, %p172
      %p175 = scmp.ne.s32.totalorder %s160, %s174
      %p176 = scmp.eq.s32.totalorder %s24, 0
      %p177 = por %p175, %p176
      %s179 = sadd.s32 %s178, 1
      %p182 = scmp.eq.s32.totalorder %s18, 1
      %p183 = scmp.ne.s32.totalorder %s178, %s180
      %p184 = scmp.eq.s32.totalorder %s18, 0
      %p185 = por %p183, %p184
      %p186 = scmp.ne.s32.totalorder %s178, %s180
      %p187 = scmp.eq.s32.totalorder %s23, 1
      %p188 = por %p186, %p187
      %p189 = scmp.ne.s32.totalorder %s180, %s181
      %p190 = scmp.eq.s32.totalorder %s23, 0
      %p191 = por %p189, %p190
      %p192 = scmp.ne.s32.totalorder %s180, %s181
      %p193 = scmp.eq.s32.totalorder %s24, 1
      %p194 = por %p192, %p193
      %p196 = scmp.ne.s32.totalorder %s181, %s195
      %p197 = scmp.eq.s32.totalorder %s24, 0
      %p198 = por %p196, %p197
      %s200 = sadd.s32 %s199, 1
      %p203 = scmp.eq.s32.totalorder %s18, 1
      %p204 = scmp.ne.s32.totalorder %s199, %s201
      %p205 = scmp.eq.s32.totalorder %s18, 0
      %p206 = por %p204, %p205
      %p207 = scmp.ne.s32.totalorder %s199, %s201
      %p208 = scmp.eq.s32.totalorder %s23, 1
      %p209 = por %p207, %p208
      %p210 = scmp.ne.s32.totalorder %s201, %s202
      %p211 = scmp.eq.s32.totalorder %s23, 0
      %p212 = por %p210, %p211
      %p213 = scmp.ne.s32.totalorder %s201, %s202
      %p214 = scmp.eq.s32.totalorder %s24, 1
      %p215 = por %p213, %p214
      %p217 = scmp.ne.s32.totalorder %s202, %s216
      %p218 = scmp.eq.s32.totalorder %s24, 0
      %p219 = por %p217, %p218
      %s220 = ssub.s32 %s18, %s25
      %p221 = scmp.eq.s32.totalorder %s220, 0
      %s223 = sadd.s32 %s222, 1
      %s224 = scalar_select %p221, %s222, %s223
      %p227 = pneg %p221
      %p228 = scmp.eq.s32.totalorder %s18, 1
      %p229 = por %p227, %p228
      %p230 = scmp.ne.s32.totalorder %s222, %s225
      %p231 = scmp.eq.s32.totalorder %s18, 0
      %p232 = por %p230, %p231
      %p233 = scmp.ne.s32.totalorder %s222, %s225
      %p234 = scmp.eq.s32.totalorder %s23, 1
      %p235 = por %p233, %p234
      %p236 = scmp.ne.s32.totalorder %s225, %s226
      %p237 = scmp.eq.s32.totalorder %s23, 0
      %p238 = por %p236, %p237
      %p239 = scmp.ne.s32.totalorder %s225, %s226
      %p240 = scmp.eq.s32.totalorder %s24, 1
      %p241 = por %p239, %p240
      %p243 = scmp.ne.s32.totalorder %s226, %s242
      %p244 = scmp.eq.s32.totalorder %s24, 0
      %p245 = por %p243, %p244
      %p246 = scmp.le.s32.totalorder 1, %s18
      %p247 = scmp.lt.s32.totalorder %s18, 3
      %p248 = pnand %p246, %p247
      %p249 = pneg %p248
      // Predicated region
      $region9: #{attention_forward.1} parent=5 // pred_check
        _
      $region10: #{attention_forward.1} parent=5 // pred_check_branch
        %251 = sbr.rel (%p248) target = $region12
      $region11: #{attention_forward.1} parent=5 // pred_region
        %s252 = ssub.s32 %s18, 1
        // Predicated region
        $region13: #{attention_forward.1} parent=11 // pred_check
          %p253 = pneg %p65
        $region14: #{attention_forward.1} parent=11 // pred_check_branch
          %255 = sbr.rel (%p253) target = $region16
        $region15: #{attention_forward.1} parent=11 // pred_region
          _
        $region16: #{attention_forward.1} parent=11 // pred_fallthru
          _
        // Predicated region
        $region17: #{attention_forward.1} parent=11 // pred_check
          %p256 = pneg %p86
        $region18: #{attention_forward.1} parent=11 // pred_check_branch
          %258 = sbr.rel (%p256) target = $region20
        $region19: #{attention_forward.1} parent=11 // pred_region
          _
        $region20: #{attention_forward.1} parent=11 // pred_fallthru
          _
        // Predicated region
        $region21: #{attention_forward.1} parent=11 // pred_check
          %p259 = pneg %p107
        $region22: #{attention_forward.1} parent=11 // pred_check_branch
          %261 = sbr.rel (%p259) target = $region24
        $region23: #{attention_forward.1} parent=11 // pred_region
          _
        $region24: #{attention_forward.1} parent=11 // pred_fallthru
          _
        // Predicated region
        $region25: #{attention_forward.1} parent=11 // pred_check
          %p262 = pneg %p128
        $region26: #{attention_forward.1} parent=11 // pred_check_branch
          %264 = sbr.rel (%p262) target = $region28
        $region27: #{attention_forward.1} parent=11 // pred_region
          _
        $region28: #{attention_forward.1} parent=11 // pred_fallthru
          _
        // Predicated region
        $region29: #{attention_forward.1} parent=11 // pred_check
          %p265 = pneg %p149
        $region30: #{attention_forward.1} parent=11 // pred_check_branch
          %267 = sbr.rel (%p265) target = $region32
        $region31: #{attention_forward.1} parent=11 // pred_region
          _
        $region32: #{attention_forward.1} parent=11 // pred_fallthru
          _
        // Predicated region
        $region33: #{attention_forward.1} parent=11 // pred_check
          %p268 = pneg %p170
        $region34: #{attention_forward.1} parent=11 // pred_check_branch
          %270 = sbr.rel (%p268) target = $region36
        $region35: #{attention_forward.1} parent=11 // pred_region
          _
        $region36: #{attention_forward.1} parent=11 // pred_fallthru
          _
        // Predicated region
        $region37: #{attention_forward.1} parent=11 // pred_check
          %p271 = pneg %p191
        $region38: #{attention_forward.1} parent=11 // pred_check_branch
          %273 = sbr.rel (%p271) target = $region40
        $region39: #{attention_forward.1} parent=11 // pred_region
          _
        $region40: #{attention_forward.1} parent=11 // pred_fallthru
          _
        // Predicated region
        $region41: #{attention_forward.1} parent=11 // pred_check
          %p274 = pneg %p212
        $region42: #{attention_forward.1} parent=11 // pred_check_branch
          %276 = sbr.rel (%p274) target = $region44
        $region43: #{attention_forward.1} parent=11 // pred_region
          _
        $region44: #{attention_forward.1} parent=11 // pred_fallthru
          _
      $region12: #{attention_forward.1} parent=5 // pred_fallthru
        _
      %p277 = scmp.lt.s32.totalorder %s18, 2
      // Predicated region
      $region45: #{attention_forward.1} parent=5 // pred_check
        %p278 = pneg %p277
      $region46: #{attention_forward.1} parent=5 // pred_check_branch
        %280 = sbr.rel (%p278) target = $region48
      $region47: #{attention_forward.1} parent=5 // pred_region
        // Predicated region
        $region49: #{attention_forward.1} parent=47 // pred_check
          %p281 = pneg %p38
        $region50: #{attention_forward.1} parent=47 // pred_check_branch
          %283 = sbr.rel (%p281) target = $region52
        $region51: #{attention_forward.1} parent=47 // pred_region
          %p284 = scmp.lt.s32.totalorder %s18, 1
          %s285 = scalar_select %p284, %s18, 1
          %s286 = smul.addr %s285, 8
          %s287 = scalar_lea.vmem %s0, %s286
        $region52: #{attention_forward.1} parent=47 // pred_fallthru
          _
      $region48: #{attention_forward.1} parent=5 // pred_fallthru
        _
      %p288 = scmp.le.s32.totalorder 1, %s18
      %p289 = scmp.lt.s32.totalorder %s18, 3
      %p290 = pnand %p288, %p289
      %p291 = pneg %p290
      // Predicated region
      $region53: #{attention_forward.1} parent=5 // pred_check
        _
      $region54: #{attention_forward.1} parent=5 // pred_check_branch
        %293 = sbr.rel (%p290) target = $region56
      $region55: #{attention_forward.1} parent=5 // pred_region
        %s294 = ssub.s32 %s18, 1
        %p295 = scmp.lt.s32.totalorder %s23, 1
        %s296 = scalar_select %p295, %s23, 1
        %s297 = smul.addr %s296, 8
        %s298 = scalar_lea.vmem %s0, %s297
        %p299 = pneg %p44
        %p300 = pneg %p41
        %p301 = pneg %p65
        %p302 = pneg %p62
        %p303 = pneg %p86
        %p304 = pneg %p83
        %p305 = pneg %p107
        %p306 = pneg %p104
        %p307 = pneg %p128
        %p308 = pneg %p125
        %p309 = pneg %p149
        %p310 = pneg %p146
        %p311 = pneg %p170
        %p312 = pneg %p167
        %p313 = pneg %p191
        %p314 = pneg %p188
        %p315 = pneg %p212
        %p316 = pneg %p209
        %p317 = pneg %p238
        %p318 = pneg %p235
        %s319 = sand.u32 %s225, 1
        %s320 = scalar_lea.sflag [#allocation3], %s319
        %s321 = sand.u32 %s225, 1
        %s322 = smul.addr %s321, 8
        %s323 = scalar_lea.vmem [#allocation2], %s322
        %p324 = scmp.lt.s32.totalorder %s23, 1
        %s325 = scalar_select %p324, %s23, 1
        %s326 = smul.addr %s325, 8
        %s327 = scalar_lea.vmem %s0, %s326
        %v328 = vld [vmem:[%s327] sm:$0xff]
        %v329 = vld [vmem:[%s1] sm:$0xff]
        %v330 = vld [vmem:[%s1 + $0x8] sm:$0xff]
        %v331 = vld [vmem:[%s1 + $0x10] sm:$0xff]
        %v332 = vld [vmem:[%s1 + $0x18] sm:$0xff]
        %v333 = vld [vmem:[%s1 + $0x20] sm:$0xff]
        %v334 = vld [vmem:[%s1 + $0x28] sm:$0xff]
        %v335 = vld [vmem:[%s1 + $0x30] sm:$0xff]
        %v336 = vld [vmem:[%s1 + $0x38] sm:$0xff]
        %v337 = vld [vmem:[%s1 + $0x40] sm:$0xff]
        %v338 = vld [vmem:[%s1 + $0x48] sm:$0xff]
        %v339 = vld [vmem:[%s1 + $0x50] sm:$0xff]
        %v340 = vld [vmem:[%s1 + $0x58] sm:$0xff]
        %v341 = vld [vmem:[%s1 + $0x60] sm:$0xff]
        %v342 = vld [vmem:[%s1 + $0x68] sm:$0xff]
        %v343 = vld [vmem:[%s1 + $0x70] sm:$0xff]
        %v344 = vld [vmem:[%s1 + $0x78] sm:$0xff]
        %v345 = vld [vmem:[%s4] sm:$0x1]
        %v346 = vld [vmem:[%s4 + $0x1] sm:$0x1]
        %v347 = vld [vmem:[%s4 + $0x2] sm:$0x1]
        %v348 = vld [vmem:[%s4 + $0x3] sm:$0x1]
        %v353 = vperm.slane %v345, 0
        %v354 = vperm.slane %v346, 0
        %v355 = vperm.slane %v347, 0
        %v356 = vperm.slane %v348, 0
        %vm361 = vcmask 261120
        %v363 = vsel %vm361, %v328, 0
        %365 = vmatpush.msra.mxu0 0.0
        %366 = vmatpush.msra.mxu0 0.0
        %367 = vmatpush.msra.mxu0 0.0
        %368 = vmatpush.msra.mxu0 0.0
        %369 = vmatpush.msra.mxu0 0.0
        %370 = vmatpush.msra.mxu0 0.0
        %371 = vmatpush.msra.mxu0 0.0
        %372 = vmatpush.msra.mxu0 0.0
        %373 = vmatpush.msra.mxu0 0.0
        %374 = vmatpush.msra.mxu0 0.0
        %375 = vmatpush.msra.mxu0 0.0
        %376 = vmatpush.msra.mxu0 0.0
        %377 = vmatpush.msra.mxu0 %v332
        %378 = vmatpush.msra.mxu0 %v331
        %379 = vmatpush.msra.mxu0 %v330
        %380 = vmatpush.msra.mxu0 %v329
        %381 = vmatmul.f32.gmra.mxu0 %v363
        %v382 = vpop.f32.mrf.mxu0
        %v383 = vadd.f32 %v353, %v382
        %384 = vdwg.mxu0
        %385 = vmatpush.msra.mxu0 0.0
        %386 = vmatpush.msra.mxu0 0.0
        %387 = vmatpush.msra.mxu0 0.0
        %388 = vmatpush.msra.mxu0 0.0
        %389 = vmatpush.msra.mxu0 0.0
        %390 = vmatpush.msra.mxu0 0.0
        %391 = vmatpush.msra.mxu0 0.0
        %392 = vmatpush.msra.mxu0 0.0
        %393 = vmatpush.msra.mxu0 0.0
        %394 = vmatpush.msra.mxu0 0.0
        %395 = vmatpush.msra.mxu0 0.0
        %396 = vmatpush.msra.mxu0 0.0
        %397 = vmatpush.msra.mxu0 %v336
        %398 = vmatpush.msra.mxu0 %v335
        %399 = vmatpush.msra.mxu0 %v334
        %400 = vmatpush.msra.mxu0 %v333
        %401 = vmatmul.f32.gmra.mxu0 %v363
        %v402 = vpop.f32.mrf.mxu0
        %v403 = vadd.f32 %v354, %v402
        %404 = vdwg.mxu0
        %405 = vmatpush.msra.mxu0 0.0
        %406 = vmatpush.msra.mxu0 0.0
        %407 = vmatpush.msra.mxu0 0.0
        %408 = vmatpush.msra.mxu0 0.0
        %409 = vmatpush.msra.mxu0 0.0
        %410 = vmatpush.msra.mxu0 0.0
        %411 = vmatpush.msra.mxu0 0.0
        %412 = vmatpush.msra.mxu0 0.0
        %413 = vmatpush.msra.mxu0 0.0
        %414 = vmatpush.msra.mxu0 0.0
        %415 = vmatpush.msra.mxu0 0.0
        %416 = vmatpush.msra.mxu0 0.0
        %417 = vmatpush.msra.mxu0 %v340
        %418 = vmatpush.msra.mxu0 %v339
        %419 = vmatpush.msra.mxu0 %v338
        %420 = vmatpush.msra.mxu0 %v337
        %421 = vmatmul.f32.gmra.mxu0 %v363
        %v422 = vpop.f32.mrf.mxu0
        %v423 = vadd.f32 %v355, %v422
        %424 = vdwg.mxu0
        %425 = vmatpush.msra.mxu0 0.0
        %426 = vmatpush.msra.mxu0 0.0
        %427 = vmatpush.msra.mxu0 0.0
        %428 = vmatpush.msra.mxu0 0.0
        %429 = vmatpush.msra.mxu0 0.0
        %430 = vmatpush.msra.mxu0 0.0
        %431 = vmatpush.msra.mxu0 0.0
        %432 = vmatpush.msra.mxu0 0.0
        %433 = vmatpush.msra.mxu0 0.0
        %434 = vmatpush.msra.mxu0 0.0
        %435 = vmatpush.msra.mxu0 0.0
        %436 = vmatpush.msra.mxu0 0.0
        %437 = vmatpush.msra.mxu0 %v344
        %438 = vmatpush.msra.mxu0 %v343
        %439 = vmatpush.msra.mxu0 %v342
        %440 = vmatpush.msra.mxu0 %v341
        %441 = vmatmul.f32.gmra.mxu0 %v363
        %v442 = vpop.f32.mrf.mxu0
        %v443 = vadd.f32 %v356, %v442
        %444 = vdwg.mxu0
        %v445 = vld [vmem:[%s2] sm:$0xff]
        %v446 = vld [vmem:[%s2 + $0x8] sm:$0xff]
        %v447 = vld [vmem:[%s2 + $0x10] sm:$0xff]
        %v448 = vld [vmem:[%s2 + $0x18] sm:$0xff]
        %v449 = vld [vmem:[%s2 + $0x20] sm:$0xff]
        %v450 = vld [vmem:[%s2 + $0x28] sm:$0xff]
        %v451 = vld [vmem:[%s2 + $0x30] sm:$0xff]
        %v452 = vld [vmem:[%s2 + $0x38] sm:$0xff]
        %v453 = vld [vmem:[%s2 + $0x40] sm:$0xff]
        %v454 = vld [vmem:[%s2 + $0x48] sm:$0xff]
        %v455 = vld [vmem:[%s2 + $0x50] sm:$0xff]
        %v456 = vld [vmem:[%s2 + $0x58] sm:$0xff]
        %v457 = vld [vmem:[%s2 + $0x60] sm:$0xff]
        %v458 = vld [vmem:[%s2 + $0x68] sm:$0xff]
        %v459 = vld [vmem:[%s2 + $0x70] sm:$0xff]
        %v460 = vld [vmem:[%s2 + $0x78] sm:$0xff]
        %v461 = vld [vmem:[%s5] sm:$0x1]
        %v462 = vld [vmem:[%s5 + $0x1] sm:$0x1]
        %v463 = vld [vmem:[%s5 + $0x2] sm:$0x1]
        %v464 = vld [vmem:[%s5 + $0x3] sm:$0x1]
        %v469 = vperm.slane %v461, 0
        %v470 = vperm.slane %v462, 0
        %v471 = vperm.slane %v463, 0
        %v472 = vperm.slane %v464, 0
        %477 = vmatpush.msra.mxu0 0.0
        %478 = vmatpush.msra.mxu0 0.0
        %479 = vmatpush.msra.mxu0 0.0
        %480 = vmatpush.msra.mxu0 0.0
        %481 = vmatpush.msra.mxu0 0.0
        %482 = vmatpush.msra.mxu0 0.0
        %483 = vmatpush.msra.mxu0 0.0
        %484 = vmatpush.msra.mxu0 0.0
        %485 = vmatpush.msra.mxu0 0.0
        %486 = vmatpush.msra.mxu0 0.0
        %487 = vmatpush.msra.mxu0 0.0
        %488 = vmatpush.msra.mxu0 0.0
        %489 = vmatpush.msra.mxu0 %v448
        %490 = vmatpush.msra.mxu0 %v447
        %491 = vmatpush.msra.mxu0 %v446
        %492 = vmatpush.msra.mxu0 %v445
        %493 = vmatmul.f32.gmra.mxu0 %v363
        %v494 = vpop.f32.mrf.mxu0
        %v495 = vadd.f32 %v469, %v494
        %496 = vdwg.mxu0
        %497 = vmatpush.msra.mxu0 0.0
        %498 = vmatpush.msra.mxu0 0.0
        %499 = vmatpush.msra.mxu0 0.0
        %500 = vmatpush.msra.mxu0 0.0
        %501 = vmatpush.msra.mxu0 0.0
        %502 = vmatpush.msra.mxu0 0.0
        %503 = vmatpush.msra.mxu0 0.0
        %504 = vmatpush.msra.mxu0 0.0
        %505 = vmatpush.msra.mxu0 0.0
        %506 = vmatpush.msra.mxu0 0.0
        %507 = vmatpush.msra.mxu0 0.0
        %508 = vmatpush.msra.mxu0 0.0
        %509 = vmatpush.msra.mxu0 %v452
        %510 = vmatpush.msra.mxu0 %v451
        %511 = vmatpush.msra.mxu0 %v450
        %512 = vmatpush.msra.mxu0 %v449
        %513 = vmatmul.f32.gmra.mxu0 %v363
        %v514 = vpop.f32.mrf.mxu0
        %v515 = vadd.f32 %v470, %v514
        %516 = vdwg.mxu0
        %517 = vmatpush.msra.mxu0 0.0
        %518 = vmatpush.msra.mxu0 0.0
        %519 = vmatpush.msra.mxu0 0.0
        %520 = vmatpush.msra.mxu0 0.0
        %521 = vmatpush.msra.mxu0 0.0
        %522 = vmatpush.msra.mxu0 0.0
        %523 = vmatpush.msra.mxu0 0.0
        %524 = vmatpush.msra.mxu0 0.0
        %525 = vmatpush.msra.mxu0 0.0
        %526 = vmatpush.msra.mxu0 0.0
        %527 = vmatpush.msra.mxu0 0.0
        %528 = vmatpush.msra.mxu0 0.0
        %529 = vmatpush.msra.mxu0 %v456
        %530 = vmatpush.msra.mxu0 %v455
        %531 = vmatpush.msra.mxu0 %v454
        %532 = vmatpush.msra.mxu0 %v453
        %533 = vmatmul.f32.gmra.mxu0 %v363
        %v534 = vpop.f32.mrf.mxu0
        %v535 = vadd.f32 %v471, %v534
        %536 = vdwg.mxu0
        %537 = vmatpush.msra.mxu0 0.0
        %538 = vmatpush.msra.mxu0 0.0
        %539 = vmatpush.msra.mxu0 0.0
        %540 = vmatpush.msra.mxu0 0.0
        %541 = vmatpush.msra.mxu0 0.0
        %542 = vmatpush.msra.mxu0 0.0
        %543 = vmatpush.msra.mxu0 0.0
        %544 = vmatpush.msra.mxu0 0.0
        %545 = vmatpush.msra.mxu0 0.0
        %546 = vmatpush.msra.mxu0 0.0
        %547 = vmatpush.msra.mxu0 0.0
        %548 = vmatpush.msra.mxu0 0.0
        %549 = vmatpush.msra.mxu0 %v460
        %550 = vmatpush.msra.mxu0 %v459
        %551 = vmatpush.msra.mxu0 %v458
        %552 = vmatpush.msra.mxu0 %v457
        %553 = vmatmul.f32.gmra.mxu0 %v363
        %v554 = vpop.f32.mrf.mxu0
        %v555 = vadd.f32 %v472, %v554
        %556 = vdwg.mxu0
        %v557 = vld [vmem:[%s3] sm:$0xff]
        %v558 = vld [vmem:[%s3 + $0x8] sm:$0xff]
        %v559 = vld [vmem:[%s3 + $0x10] sm:$0xff]
        %v560 = vld [vmem:[%s3 + $0x18] sm:$0xff]
        %v561 = vld [vmem:[%s3 + $0x20] sm:$0xff]
        %v562 = vld [vmem:[%s3 + $0x28] sm:$0xff]
        %v563 = vld [vmem:[%s3 + $0x30] sm:$0xff]
        %v564 = vld [vmem:[%s3 + $0x38] sm:$0xff]
        %v565 = vld [vmem:[%s3 + $0x40] sm:$0xff]
        %v566 = vld [vmem:[%s3 + $0x48] sm:$0xff]
        %v567 = vld [vmem:[%s3 + $0x50] sm:$0xff]
        %v568 = vld [vmem:[%s3 + $0x58] sm:$0xff]
        %v569 = vld [vmem:[%s3 + $0x60] sm:$0xff]
        %v570 = vld [vmem:[%s3 + $0x68] sm:$0xff]
        %v571 = vld [vmem:[%s3 + $0x70] sm:$0xff]
        %v572 = vld [vmem:[%s3 + $0x78] sm:$0xff]
        %v573 = vld [vmem:[%s6] sm:$0x1]
        %v574 = vld [vmem:[%s6 + $0x1] sm:$0x1]
        %v575 = vld [vmem:[%s6 + $0x2] sm:$0x1]
        %v576 = vld [vmem:[%s6 + $0x3] sm:$0x1]
        %v581 = vperm.slane %v573, 0
        %v582 = vperm.slane %v574, 0
        %v583 = vperm.slane %v575, 0
        %v584 = vperm.slane %v576, 0
        %589 = vmatpush.msra.mxu0 0.0
        %590 = vmatpush.msra.mxu0 0.0
        %591 = vmatpush.msra.mxu0 0.0
        %592 = vmatpush.msra.mxu0 0.0
        %593 = vmatpush.msra.mxu0 0.0
        %594 = vmatpush.msra.mxu0 0.0
        %595 = vmatpush.msra.mxu0 0.0
        %596 = vmatpush.msra.mxu0 0.0
        %597 = vmatpush.msra.mxu0 0.0
        %598 = vmatpush.msra.mxu0 0.0
        %599 = vmatpush.msra.mxu0 0.0
        %600 = vmatpush.msra.mxu0 0.0
        %601 = vmatpush.msra.mxu0 %v560
        %602 = vmatpush.msra.mxu0 %v559
        %603 = vmatpush.msra.mxu0 %v558
        %604 = vmatpush.msra.mxu0 %v557
        %605 = vmatmul.f32.gmra.mxu0 %v363
        %v606 = vpop.f32.mrf.mxu0
        %v607 = vadd.f32 %v581, %v606
        %608 = vdwg.mxu0
        %609 = vmatpush.msra.mxu0 0.0
        %610 = vmatpush.msra.mxu0 0.0
        %611 = vmatpush.msra.mxu0 0.0
        %612 = vmatpush.msra.mxu0 0.0
        %613 = vmatpush.msra.mxu0 0.0
        %614 = vmatpush.msra.mxu0 0.0
        %615 = vmatpush.msra.mxu0 0.0
        %616 = vmatpush.msra.mxu0 0.0
        %617 = vmatpush.msra.mxu0 0.0
        %618 = vmatpush.msra.mxu0 0.0
        %619 = vmatpush.msra.mxu0 0.0
        %620 = vmatpush.msra.mxu0 0.0
        %621 = vmatpush.msra.mxu0 %v564
        %622 = vmatpush.msra.mxu0 %v563
        %623 = vmatpush.msra.mxu0 %v562
        %624 = vmatpush.msra.mxu0 %v561
        %625 = vmatmul.f32.gmra.mxu0 %v363
        %v626 = vpop.f32.mrf.mxu0
        %v627 = vadd.f32 %v582, %v626
        %628 = vdwg.mxu0
        %629 = vmatpush.msra.mxu0 0.0
        %630 = vmatpush.msra.mxu0 0.0
        %631 = vmatpush.msra.mxu0 0.0
        %632 = vmatpush.msra.mxu0 0.0
        %633 = vmatpush.msra.mxu0 0.0
        %634 = vmatpush.msra.mxu0 0.0
        %635 = vmatpush.msra.mxu0 0.0
        %636 = vmatpush.msra.mxu0 0.0
        %637 = vmatpush.msra.mxu0 0.0
        %638 = vmatpush.msra.mxu0 0.0
        %639 = vmatpush.msra.mxu0 0.0
        %640 = vmatpush.msra.mxu0 0.0
        %641 = vmatpush.msra.mxu0 %v568
        %642 = vmatpush.msra.mxu0 %v567
        %643 = vmatpush.msra.mxu0 %v566
        %644 = vmatpush.msra.mxu0 %v565
        %645 = vmatmul.f32.gmra.mxu0 %v363
        %v646 = vpop.f32.mrf.mxu0
        %v647 = vadd.f32 %v583, %v646
        %648 = vdwg.mxu0
        %649 = vmatpush.msra.mxu0 0.0
        %650 = vmatpush.msra.mxu0 0.0
        %651 = vmatpush.msra.mxu0 0.0
        %652 = vmatpush.msra.mxu0 0.0
        %653 = vmatpush.msra.mxu0 0.0
        %654 = vmatpush.msra.mxu0 0.0
        %655 = vmatpush.msra.mxu0 0.0
        %656 = vmatpush.msra.mxu0 0.0
        %657 = vmatpush.msra.mxu0 0.0
        %658 = vmatpush.msra.mxu0 0.0
        %659 = vmatpush.msra.mxu0 0.0
        %660 = vmatpush.msra.mxu0 0.0
        %661 = vmatpush.msra.mxu0 %v572
        %662 = vmatpush.msra.mxu0 %v571
        %663 = vmatpush.msra.mxu0 %v570
        %664 = vmatpush.msra.mxu0 %v569
        %665 = vmatmul.f32.gmra.mxu0 %v363
        %v666 = vpop.f32.mrf.mxu0
        %v667 = vadd.f32 %v584, %v666
        %668 = vdwg.mxu0
        %vm669 = vcmask 64512
        %v671 = vsel %vm669, %v383, 0
        %v674 = vsel %vm669, %v495, 0
        %676 = vmatpush.xpose.msra.mxu0 0.0
        %677 = vmatpush.xpose.msra.mxu0 0.0
        %678 = vmatpush.xpose.msra.mxu0 0.0
        %679 = vmatpush.xpose.msra.mxu0 0.0
        %680 = vmatpush.xpose.msra.mxu0 0.0
        %681 = vmatpush.xpose.msra.mxu0 0.0
        %682 = vmatpush.xpose.msra.mxu0 0.0
        %683 = vmatpush.xpose.msra.mxu0 0.0
        %684 = vmatpush.xpose.msra.mxu0 0.0
        %685 = vmatpush.xpose.msra.mxu0 0.0
        %686 = vmatpush.xpose.msra.mxu0 0.0
        %687 = vmatpush.xpose.msra.mxu0 0.0
        %688 = vmatpush.xpose.msra.mxu0 0.0
        %689 = vmatpush.xpose.msra.mxu0 0.0
        %690 = vmatpush.xpose.msra.mxu0 0.0
        %691 = vmatpush.xpose.msra.mxu0 %v674
        %692 = vmatmul.f32.gmra.mxu0 %v671
        %v693 = vpop.f32.mrf.mxu0
        %v694 = vadd.f32 0.0, %v693
        %695 = vdwg.mxu0
        %v697 = vsel %vm669, %v403, 0
        %v700 = vsel %vm669, %v515, 0
        %702 = vmatpush.xpose.msra.mxu0 0.0
        %703 = vmatpush.xpose.msra.mxu0 0.0
        %704 = vmatpush.xpose.msra.mxu0 0.0
        %705 = vmatpush.xpose.msra.mxu0 0.0
        %706 = vmatpush.xpose.msra.mxu0 0.0
        %707 = vmatpush.xpose.msra.mxu0 0.0
        %708 = vmatpush.xpose.msra.mxu0 0.0
        %709 = vmatpush.xpose.msra.mxu0 0.0
        %710 = vmatpush.xpose.msra.mxu0 0.0
        %711 = vmatpush.xpose.msra.mxu0 0.0
        %712 = vmatpush.xpose.msra.mxu0 0.0
        %713 = vmatpush.xpose.msra.mxu0 0.0
        %714 = vmatpush.xpose.msra.mxu0 0.0
        %715 = vmatpush.xpose.msra.mxu0 0.0
        %716 = vmatpush.xpose.msra.mxu0 0.0
        %717 = vmatpush.xpose.msra.mxu0 %v700
        %718 = vmatmul.f32.gmra.mxu0 %v697
        %v719 = vpop.f32.mrf.mxu0
        %v720 = vadd.f32 0.0, %v719
        %721 = vdwg.mxu0
        %v723 = vsel %vm669, %v423, 0
        %v726 = vsel %vm669, %v535, 0
        %728 = vmatpush.xpose.msra.mxu0 0.0
        %729 = vmatpush.xpose.msra.mxu0 0.0
        %730 = vmatpush.xpose.msra.mxu0 0.0
        %731 = vmatpush.xpose.msra.mxu0 0.0
        %732 = vmatpush.xpose.msra.mxu0 0.0
        %733 = vmatpush.xpose.msra.mxu0 0.0
        %734 = vmatpush.xpose.msra.mxu0 0.0
        %735 = vmatpush.xpose.msra.mxu0 0.0
        %736 = vmatpush.xpose.msra.mxu0 0.0
        %737 = vmatpush.xpose.msra.mxu0 0.0
        %738 = vmatpush.xpose.msra.mxu0 0.0
        %739 = vmatpush.xpose.msra.mxu0 0.0
        %740 = vmatpush.xpose.msra.mxu0 0.0
        %741 = vmatpush.xpose.msra.mxu0 0.0
        %742 = vmatpush.xpose.msra.mxu0 0.0
        %743 = vmatpush.xpose.msra.mxu0 %v726
        %744 = vmatmul.f32.gmra.mxu0 %v723
        %v745 = vpop.f32.mrf.mxu0
        %v746 = vadd.f32 0.0, %v745
        %747 = vdwg.mxu0
        %v749 = vsel %vm669, %v443, 0
        %v752 = vsel %vm669, %v555, 0
        %754 = vmatpush.xpose.msra.mxu0 0.0
        %755 = vmatpush.xpose.msra.mxu0 0.0
        %756 = vmatpush.xpose.msra.mxu0 0.0
        %757 = vmatpush.xpose.msra.mxu0 0.0
        %758 = vmatpush.xpose.msra.mxu0 0.0
        %759 = vmatpush.xpose.msra.mxu0 0.0
        %760 = vmatpush.xpose.msra.mxu0 0.0
        %761 = vmatpush.xpose.msra.mxu0 0.0
        %762 = vmatpush.xpose.msra.mxu0 0.0
        %763 = vmatpush.xpose.msra.mxu0 0.0
        %764 = vmatpush.xpose.msra.mxu0 0.0
        %765 = vmatpush.xpose.msra.mxu0 0.0
        %766 = vmatpush.xpose.msra.mxu0 0.0
        %767 = vmatpush.xpose.msra.mxu0 0.0
        %768 = vmatpush.xpose.msra.mxu0 0.0
        %769 = vmatpush.xpose.msra.mxu0 %v752
        %770 = vmatmul.f32.gmra.mxu0 %v749
        %v771 = vpop.f32.mrf.mxu0
        %v772 = vadd.f32 0.0, %v771
        %773 = vdwg.mxu0
        %v774 = vmul.f32 %v694, 0.35355338
        %v775 = vmul.f32 %v720, 0.35355338
        %v776 = vmul.f32 %v746, 0.35355338
        %v777 = vmul.f32 %v772, 0.35355338
        %v778 = vsel %vm669, %v774, -inf
        %779 = vmax.xlane.f32.xlu0 %v778
        %v780 = vpop.xlane.xlu0 %779
        %v781 = vsel %vm669, %v775, -inf
        %782 = vmax.xlane.f32.xlu0 %v781
        %v783 = vpop.xlane.xlu0 %782
        %v784 = vsel %vm669, %v776, -inf
        %785 = vmax.xlane.f32.xlu0 %v784
        %v786 = vpop.xlane.xlu0 %785
        %v787 = vsel %vm669, %v777, -inf
        %788 = vmax.xlane.f32.xlu0 %v787
        %v789 = vpop.xlane.xlu0 %788
        %v790 = vsub.f32 %v774, %v780
        %v791 = vsub.f32 %v775, %v783
        %v792 = vsub.f32 %v776, %v786
        %v793 = vsub.f32 %v777, %v789
        %v794 = vmul.f32 %v790, 1.442695
        %v795 = vpow.pop %v794
        %v796 = vmul.f32 %v791, 1.442695
        %v797 = vpow.pop %v796
        %v798 = vmul.f32 %v792, 1.442695
        %v799 = vpow.pop %v798
        %v800 = vmul.f32 %v793, 1.442695
        %v801 = vpow.pop %v800
        %v802 = vsel %vm669, %v795, 0.0
        %803 = vadd.xlane.f32.xlu0 %v802
        %v804 = vpop.xlane.xlu0 %803
        %v805 = vsel %vm669, %v797, 0.0
        %806 = vadd.xlane.f32.xlu0 %v805
        %v807 = vpop.xlane.xlu0 %806
        %v808 = vsel %vm669, %v799, 0.0
        %809 = vadd.xlane.f32.xlu0 %v808
        %v810 = vpop.xlane.xlu0 %809
        %v811 = vsel %vm669, %v801, 0.0
        %812 = vadd.xlane.f32.xlu0 %v811
        %v813 = vpop.xlane.xlu0 %812
        %v814 = vrcp.pop %v804
        %v815 = vmul.f32 %v804, %v814
        %v816 = vsub.f32 1.0, %v815
        %v817 = vmul.f32 %v814, %v816
        %v818 = vadd.f32 %v814, %v817
        %vm819 = vweird.f32 %v804
        %vm820 = vweird.f32 %v814
        %vm821 = vmor %vm819, %vm820
        %v822 = vsel %vm821, %v814, %v818
        %v823 = vand.u32 2147483647, %v804
        %vm824 = vcmp.eq.f32.partialorder %v823, 8.507059e+37
        %v825 = vand.u32 %v804, 2147483648
        %v826 = vor.u32 1.1754944e-38, %v825
        %v827 = vsel %vm824, %v826, %v822
        %v828 = vmul.f32 %v795, %v827
        %v829 = vrcp.pop %v807
        %v830 = vmul.f32 %v807, %v829
        %v831 = vsub.f32 1.0, %v830
        %v832 = vmul.f32 %v829, %v831
        %v833 = vadd.f32 %v829, %v832
        %vm834 = vweird.f32 %v807
        %vm835 = vweird.f32 %v829
        %vm836 = vmor %vm834, %vm835
        %v837 = vsel %vm836, %v829, %v833
        %v838 = vand.u32 2147483647, %v807
        %vm839 = vcmp.eq.f32.partialorder %v838, 8.507059e+37
        %v840 = vand.u32 %v807, 2147483648
        %v841 = vor.u32 1.1754944e-38, %v840
        %v842 = vsel %vm839, %v841, %v837
        %v843 = vmul.f32 %v797, %v842
        %v844 = vrcp.pop %v810
        %v845 = vmul.f32 %v810, %v844
        %v846 = vsub.f32 1.0, %v845
        %v847 = vmul.f32 %v844, %v846
        %v848 = vadd.f32 %v844, %v847
        %vm849 = vweird.f32 %v810
        %vm850 = vweird.f32 %v844
        %vm851 = vmor %vm849, %vm850
        %v852 = vsel %vm851, %v844, %v848
        %v853 = vand.u32 2147483647, %v810
        %vm854 = vcmp.eq.f32.partialorder %v853, 8.507059e+37
        %v855 = vand.u32 %v810, 2147483648
        %v856 = vor.u32 1.1754944e-38, %v855
        %v857 = vsel %vm854, %v856, %v852
        %v858 = vmul.f32 %v799, %v857
        %v859 = vrcp.pop %v813
        %v860 = vmul.f32 %v813, %v859
        %v861 = vsub.f32 1.0, %v860
        %v862 = vmul.f32 %v859, %v861
        %v863 = vadd.f32 %v859, %v862
        %vm864 = vweird.f32 %v813
        %vm865 = vweird.f32 %v859
        %vm866 = vmor %vm864, %vm865
        %v867 = vsel %vm866, %v859, %v863
        %v868 = vand.u32 2147483647, %v813
        %vm869 = vcmp.eq.f32.partialorder %v868, 8.507059e+37
        %v870 = vand.u32 %v813, 2147483648
        %v871 = vor.u32 1.1754944e-38, %v870
        %v872 = vsel %vm869, %v871, %v867
        %v873 = vmul.f32 %v801, %v872
        %v875 = vsel %vm669, %v828, 0
        %877 = vmatpush.msra.mxu0 0.0
        %878 = vmatpush.msra.mxu0 0.0
        %879 = vmatpush.msra.mxu0 0.0
        %880 = vmatpush.msra.mxu0 0.0
        %881 = vmatpush.msra.mxu0 0.0
        %882 = vmatpush.msra.mxu0 0.0
        %883 = vmatpush.msra.mxu0 0.0
        %884 = vmatpush.msra.mxu0 0.0
        %885 = vmatpush.msra.mxu0 0.0
        %886 = vmatpush.msra.mxu0 0.0
        %887 = vmatpush.msra.mxu0 0.0
        %888 = vmatpush.msra.mxu0 0.0
        %889 = vmatpush.msra.mxu0 0.0
        %890 = vmatpush.msra.mxu0 0.0
        %891 = vmatpush.msra.mxu0 0.0
        %892 = vmatpush.msra.mxu0 %v607
        %893 = vmatmul.f32.gmra.mxu0 %v875
        %v894 = vpop.f32.mrf.mxu0
        %v895 = vadd.f32 0.0, %v894
        %896 = vdwg.mxu0
        %v898 = vsel %vm669, %v843, 0
        %900 = vmatpush.msra.mxu0 0.0
        %901 = vmatpush.msra.mxu0 0.0
        %902 = vmatpush.msra.mxu0 0.0
        %903 = vmatpush.msra.mxu0 0.0
        %904 = vmatpush.msra.mxu0 0.0
        %905 = vmatpush.msra.mxu0 0.0
        %906 = vmatpush.msra.mxu0 0.0
        %907 = vmatpush.msra.mxu0 0.0
        %908 = vmatpush.msra.mxu0 0.0
        %909 = vmatpush.msra.mxu0 0.0
        %910 = vmatpush.msra.mxu0 0.0
        %911 = vmatpush.msra.mxu0 0.0
        %912 = vmatpush.msra.mxu0 0.0
        %913 = vmatpush.msra.mxu0 0.0
        %914 = vmatpush.msra.mxu0 0.0
        %915 = vmatpush.msra.mxu0 %v627
        %916 = vmatmul.f32.gmra.mxu0 %v898
        %v917 = vpop.f32.mrf.mxu0
        %v918 = vadd.f32 0.0, %v917
        %919 = vdwg.mxu0
        %v921 = vsel %vm669, %v858, 0
        %923 = vmatpush.msra.mxu0 0.0
        %924 = vmatpush.msra.mxu0 0.0
        %925 = vmatpush.msra.mxu0 0.0
        %926 = vmatpush.msra.mxu0 0.0
        %927 = vmatpush.msra.mxu0 0.0
        %928 = vmatpush.msra.mxu0 0.0
        %929 = vmatpush.msra.mxu0 0.0
        %930 = vmatpush.msra.mxu0 0.0
        %931 = vmatpush.msra.mxu0 0.0
        %932 = vmatpush.msra.mxu0 0.0
        %933 = vmatpush.msra.mxu0 0.0
        %934 = vmatpush.msra.mxu0 0.0
        %935 = vmatpush.msra.mxu0 0.0
        %936 = vmatpush.msra.mxu0 0.0
        %937 = vmatpush.msra.mxu0 0.0
        %938 = vmatpush.msra.mxu0 %v647
        %939 = vmatmul.f32.gmra.mxu0 %v921
        %v940 = vpop.f32.mrf.mxu0
        %v941 = vadd.f32 0.0, %v940
        %942 = vdwg.mxu0
        %v944 = vsel %vm669, %v873, 0
        %946 = vmatpush.msra.mxu0 0.0
        %947 = vmatpush.msra.mxu0 0.0
        %948 = vmatpush.msra.mxu0 0.0
        %949 = vmatpush.msra.mxu0 0.0
        %950 = vmatpush.msra.mxu0 0.0
        %951 = vmatpush.msra.mxu0 0.0
        %952 = vmatpush.msra.mxu0 0.0
        %953 = vmatpush.msra.mxu0 0.0
        %954 = vmatpush.msra.mxu0 0.0
        %955 = vmatpush.msra.mxu0 0.0
        %956 = vmatpush.msra.mxu0 0.0
        %957 = vmatpush.msra.mxu0 0.0
        %958 = vmatpush.msra.mxu0 0.0
        %959 = vmatpush.msra.mxu0 0.0
        %960 = vmatpush.msra.mxu0 0.0
        %961 = vmatpush.msra.mxu0 %v667
        %962 = vmatmul.f32.gmra.mxu0 %v944
        %v963 = vpop.f32.mrf.mxu0
        %v964 = vadd.f32 0.0, %v963
        %965 = vdwg.mxu0
        %v966 = vld [vmem:[%s7] sm:$0xff]
        %v967 = vld [vmem:[%s7 + $0x8] sm:$0xff]
        %v968 = vld [vmem:[%s7 + $0x10] sm:$0xff]
        %v969 = vld [vmem:[%s7 + $0x18] sm:$0xff]
        %v971 = vsel %vm669, %v895, 0
        %973 = vmatpush.msra.mxu0 0.0
        %974 = vmatpush.msra.mxu0 0.0
        %975 = vmatpush.msra.mxu0 0.0
        %976 = vmatpush.msra.mxu0 0.0
        %977 = vmatpush.msra.mxu0 0.0
        %978 = vmatpush.msra.mxu0 0.0
        %979 = vmatpush.msra.mxu0 0.0
        %980 = vmatpush.msra.mxu0 0.0
        %981 = vmatpush.msra.mxu0 0.0
        %982 = vmatpush.msra.mxu0 0.0
        %983 = vmatpush.msra.mxu0 0.0
        %984 = vmatpush.msra.mxu0 0.0
        %985 = vmatpush.msra.mxu0 0.0
        %986 = vmatpush.msra.mxu0 0.0
        %987 = vmatpush.msra.mxu0 0.0
        %988 = vmatpush.msra.mxu0 %v966
        %989 = vmatmul.f32.gmra.mxu0 %v971
        %v990 = vpop.f32.mrf.mxu0
        %v991 = vadd.f32 0.0, %v990
        %992 = vdwg.mxu0
        %v994 = vsel %vm669, %v918, 0
        %996 = vmatpush.msra.mxu0 0.0
        %997 = vmatpush.msra.mxu0 0.0
        %998 = vmatpush.msra.mxu0 0.0
        %999 = vmatpush.msra.mxu0 0.0
        %1000 = vmatpush.msra.mxu0 0.0
        %1001 = vmatpush.msra.mxu0 0.0
        %1002 = vmatpush.msra.mxu0 0.0
        %1003 = vmatpush.msra.mxu0 0.0
        %1004 = vmatpush.msra.mxu0 0.0
        %1005 = vmatpush.msra.mxu0 0.0
        %1006 = vmatpush.msra.mxu0 0.0
        %1007 = vmatpush.msra.mxu0 0.0
        %1008 = vmatpush.msra.mxu0 0.0
        %1009 = vmatpush.msra.mxu0 0.0
        %1010 = vmatpush.msra.mxu0 0.0
        %1011 = vmatpush.msra.mxu0 %v967
        %1012 = vmatmul.f32.gmra.mxu0 %v994
        %v1013 = vpop.f32.mrf.mxu0
        %v1014 = vadd.f32 0.0, %v1013
        %1015 = vdwg.mxu0
        %v1017 = vsel %vm669, %v941, 0
        %1019 = vmatpush.msra.mxu0 0.0
        %1020 = vmatpush.msra.mxu0 0.0
        %1021 = vmatpush.msra.mxu0 0.0
        %1022 = vmatpush.msra.mxu0 0.0
        %1023 = vmatpush.msra.mxu0 0.0
        %1024 = vmatpush.msra.mxu0 0.0
        %1025 = vmatpush.msra.mxu0 0.0
        %1026 = vmatpush.msra.mxu0 0.0
        %1027 = vmatpush.msra.mxu0 0.0
        %1028 = vmatpush.msra.mxu0 0.0
        %1029 = vmatpush.msra.mxu0 0.0
        %1030 = vmatpush.msra.mxu0 0.0
        %1031 = vmatpush.msra.mxu0 0.0
        %1032 = vmatpush.msra.mxu0 0.0
        %1033 = vmatpush.msra.mxu0 0.0
        %1034 = vmatpush.msra.mxu0 %v968
        %1035 = vmatmul.f32.gmra.mxu0 %v1017
        %v1036 = vpop.f32.mrf.mxu0
        %v1037 = vadd.f32 0.0, %v1036
        %1038 = vdwg.mxu0
        %v1040 = vsel %vm669, %v964, 0
        %1042 = vmatpush.msra.mxu0 0.0
        %1043 = vmatpush.msra.mxu0 0.0
        %1044 = vmatpush.msra.mxu0 0.0
        %1045 = vmatpush.msra.mxu0 0.0
        %1046 = vmatpush.msra.mxu0 0.0
        %1047 = vmatpush.msra.mxu0 0.0
        %1048 = vmatpush.msra.mxu0 0.0
        %1049 = vmatpush.msra.mxu0 0.0
        %1050 = vmatpush.msra.mxu0 0.0
        %1051 = vmatpush.msra.mxu0 0.0
        %1052 = vmatpush.msra.mxu0 0.0
        %1053 = vmatpush.msra.mxu0 0.0
        %1054 = vmatpush.msra.mxu0 0.0
        %1055 = vmatpush.msra.mxu0 0.0
        %1056 = vmatpush.msra.mxu0 0.0
        %1057 = vmatpush.msra.mxu0 %v969
        %1058 = vmatmul.f32.gmra.mxu0 %v1040
        %v1059 = vpop.f32.mrf.mxu0
        %v1060 = vadd.f32 0.0, %v1059
        %1061 = vdwg.mxu0
        %v1062 = vsel %vm361, %v991, 0.0
        %v1063 = vsel %vm361, %v1014, 0.0
        %v1064 = vadd.f32 %v1062, %v1063
        %v1065 = vsel %vm361, %v1037, 0.0
        %v1066 = vadd.f32 %v1064, %v1065
        %v1067 = vsel %vm361, %v1060, 0.0
        %v1068 = vadd.f32 %v1066, %v1067
        %v1069 = vld [vmem:[%s8] sm:$0x1]
        %v1071 = vperm.slane %v1069, 0
        %v1073 = vadd.f32 %v1068, %v1071
        %1074 = vst.msk [vmem:[%s323] sm:$0xff] %vm361, %v1073
        %s1075 = sand.u32 %s225, 1
        %s1076 = scalar_lea.sflag [#allocation3], %s1075
        %s1077 = sand.u32 %s225, 1
        %s1078 = smul.addr %s1077, 8
        %s1079 = scalar_lea.vmem [#allocation2], %s1078
        // Predicated region
        $region57: #{attention_forward.1} parent=55 // pred_check
          %p1080 = pneg %p235
        $region58: #{attention_forward.1} parent=55 // pred_check_branch
          %1082 = sbr.rel (%p1080) target = $region60
        $region59: #{attention_forward.1} parent=55 // pred_region
          %1084 = vsyncadd %s1076, 0
          %s1085 = smul.addr %s23, 8
          %s1086 = scalar_lea.hbm %s9, %s1085
          %s1088 = sshll.u32 %s1079, 4
          %s1089 = int_to_ptr.vmem [resolvable:$true] %s1088
          %s1090 = sshll.u32 %s1086, 4
          %s1091 = int_to_ptr.hbm [resolvable:$true] %s1090
          %1093 = dma.vmem_to_hbm [thread:$0]  %s1089, 128, %s1091, %s1076
        $region60: #{attention_forward.1} parent=55 // pred_fallthru
          _
      $region56: #{attention_forward.1} parent=5 // pred_fallthru
        _
      %p1094 = scmp.le.s32.totalorder 2, %s18
      // Predicated region
      $region61: #{attention_forward.1} parent=5 // pred_check
        %p1095 = pneg %p1094
      $region62: #{attention_forward.1} parent=5 // pred_check_branch
        %1097 = sbr.rel (%p1095) target = $region64
      $region63: #{attention_forward.1} parent=5 // pred_region
        %s1098 = ssub.s32 %s18, 2
        // Predicated region
        $region65: #{attention_forward.1} parent=63 // pred_check
          %p1099 = pneg %p241
        $region66: #{attention_forward.1} parent=63 // pred_check_branch
          %1101 = sbr.rel (%p1099) target = $region68
        $region67: #{attention_forward.1} parent=63 // pred_region
          %s1102 = sand.u32 %s226, 1
          %s1103 = scalar_lea.sflag [#allocation3], %s1102
          %s1104 = sand.u32 %s226, 1
          %s1105 = smul.addr %s1104, 8
          %s1106 = scalar_lea.vmem [#allocation2], %s1105
          %1108 = dma.done %s1103, 128
        $region68: #{attention_forward.1} parent=63 // pred_fallthru
          _
      $region64: #{attention_forward.1} parent=5 // pred_fallthru
        _
    $region6: #{attention_forward.1} parent=1 // loop_footer
      %s22 = sadd.s32 1, %s18
    $region7: #{attention_forward.1} parent=1 // loop_footer_branch
      %17 = sbr.rel target = $region3
    $region8: #{attention_forward.1} parent=1 // loop_exit
      _
    %1109 = vsyncpa [#allocation3], 1
    %s1110 = scalar_lea.sflag [#allocation3], 1
    %1111 = vsyncpa %s1110, 1

</llo_original>
